<compile_context>
chip_gen: v7x
topology: tpu7x:2x2x1
jax: 0.10.0
libtpu: 0.0.40
codegen_flags: <defaults>
</compile_context>

<pallas_src>
import functools

import jax
import jax.numpy as jnp
from jax import lax
from jax.experimental import pallas as pl
from jax.experimental.pallas import tpu as pltpu

EPS = 1e-3
_LANE = 128
_SUBLANE = 8


def _charbonnier_kernel(x_ref, y_ref, acc_ref, *, tile_r, tiles_per_split,
                        n_tiles, valid_s, need_mask, need_skip, fold8):
    """One (split, batch, row-tile) grid step.

    x_ref, y_ref : (1, C, tile_r, 128) lane-dense input tiles.
    acc_ref      : (1, 1, acc_rows, 128) f32 per-(split, batch) accumulator,
                   resident across the row-tile ("arbitrary") grid axis.
    """
    r = pl.program_id(2)
    t = pl.program_id(0) * tiles_per_split + r        # global row-tile index

    @pl.when(r == 0)
    def _init():
        acc_ref[...] = jnp.zeros_like(acc_ref)

    # Channel mean of squared differences, one channel slab at a time so the
    # largest VMEM temporaries are (tile_r, 128) f32, not (C, tile_r, 128).
    # For bf16 inputs the subtract stays in bf16; only one upcast per channel.
    n_ch = x_ref.shape[1]
    ssq = None
    for c in range(n_ch):
        d = (x_ref[0, c] - y_ref[0, c]).astype(jnp.float32)     # (tile_r, 128)
        ssq = d * d if ssq is None else ssq + d * d
    per_pixel = ssq * jnp.float32(1.0 / n_ch)
    error = jnp.sqrt(per_pixel + jnp.float32(EPS * EPS))        # (tile_r, 128)

    def _accumulate(err):
        if fold8:
            # Fold rows into one vreg-shaped (8, 128) partial sum: pure
            # elementwise adds over full vregs, no per-step XLU tree reduce.
            part = err.reshape(tile_r // _SUBLANE, _SUBLANE, _LANE).sum(axis=0)
        else:
            # Only possible when there is a single ragged row tile
            # (tile_r == n_rows, not a multiple of 8): store rows directly.
            part = err
        acc_ref[...] += part.reshape(acc_ref.shape)

    if not (need_mask or need_skip):
        _accumulate(error)
    else:
        # Hot path: all row tiles except the last accumulate unmasked.
        @pl.when(t < n_tiles - 1)
        def _body():
            _accumulate(error)

        # Tail tile: mask pad-to-128 zeros and unspecified partial-block rows.
        @pl.when(t == n_tiles - 1)
        def _tail():
            row = lax.broadcasted_iota(jnp.int32, (tile_r, _LANE), 0)
            col = lax.broadcasted_iota(jnp.int32, (tile_r, _LANE), 1)
            # int32 flat index is safe below ~2.1e9 pixels per image.
            flat = (t * tile_r + row) * _LANE + col
            _accumulate(jnp.where(flat < valid_s, error, 0.0))
        # Iterations with t >= n_tiles (uneven split) fall through both whens.


def _vmem_capacity_bytes():
    """Physical VMEM of the current TPU generation (conservative fallback)."""
    try:
        cap = getattr(pltpu.get_tpu_info(), "vmem_capacity_bytes", None)
        if cap:
            return int(cap)
    except Exception:
        pass
    return 64 * 1024 * 1024          # assume the smallest (v7x per-core) VMEM


def _round_up(x, m):
    return -(-x // m) * m


def _charbonnier_loss_4d(x, y):
    """x, y: (B, C, H, W). Returns scalar f32 Charbonnier loss."""
    assert x.shape == y.shape
    B, C, H, W = x.shape
    S = H * W
    itemsize = jnp.dtype(x.dtype).itemsize
    sub = max(_SUBLANE, 32 // itemsize)          # f32 -> 8, bf16 -> 16

    # Lane-dense layout: flatten spatial dims, split into rows of 128 lanes.
    s128 = _round_up(S, _LANE)
    n_rows = s128 // _LANE
    xf = x.reshape(B, C, S)
    yf = y.reshape(B, C, S)
    if s128 != S:
        # TODO(synk): only triggers when H*W % 128 != 0; costs one extra HBM
        # read+write of both tensors (pad is a copy).  A ragged (B, C, S)
        # block layout would avoid it but forces a sublane-axis channel
        # reduce / in-kernel relayout, which is worse for the common case.
        xf = jnp.pad(xf, ((0, 0), (0, 0), (0, s128 - S)))
        yf = jnp.pad(yf, ((0, 0), (0, 0), (0, s128 - S)))
    xf = xf.reshape(B, C, n_rows, _LANE)
    yf = yf.reshape(B, C, n_rows, _LANE)

    # Generation-aware tile budget (~6 MiB per input tile) plus an explicit
    # scoped-VMEM limit covering 2 inputs x 2 pipeline buffers + f32 temps.
    if _vmem_capacity_bytes() >= 96 * 1024 * 1024:   # v5e / v6e: 128 MiB VMEM
        tile_budget, vmem_limit = 6 << 20, 64 << 20
    else:                                            # v7x: 64 MiB per core
        tile_budget, vmem_limit = 6 << 20, 48 << 20
    max_r = max(sub, (tile_budget // (C * _LANE * itemsize)) // sub * sub)
    tile_r = n_rows if n_rows <= max_r else max_r

    # With a single flattened batch, split the row-tile range across a leading
    # parallel grid axis so both v7x TensorCores stream HBM (harmless on 1-TC
    # generations: at most one extra ~0.35us grid step).
    n_split = 1
    if B == 1 and n_rows >= 2 * sub:
        n_split = 2
        tile_r = min(tile_r, _round_up((n_rows + 1) // 2, sub))

    n_tiles = -(-n_rows // tile_r)                   # row tiles per image
    tiles_per_split = -(-n_tiles // n_split)
    need_skip = n_split * tiles_per_split > n_tiles
    need_mask = (s128 != S) or (n_rows % tile_r != 0)
    fold8 = tile_r % _SUBLANE == 0
    acc_rows = _SUBLANE if fold8 else tile_r         # non-fold8 => single tile

    kernel = functools.partial(
        _charbonnier_kernel, tile_r=tile_r, tiles_per_split=tiles_per_split,
        n_tiles=n_tiles, valid_s=S, need_mask=need_mask, need_skip=need_skip,
        fold8=fold8)

    def in_idx(s, b, r):
        t = s * tiles_per_split + r
        if need_skip:
            # Overflow iterations of an uneven split re-read the last tile;
            # their contribution is skipped inside the kernel.
            t = jnp.minimum(t, n_tiles - 1)
        return (b, 0, t, 0)

    in_spec = pl.BlockSpec((1, C, tile_r, _LANE), in_idx)
    out_spec = pl.BlockSpec((1, 1, acc_rows, _LANE),
                            lambda s, b, r: (s, b, 0, 0))

    cost = pl.CostEstimate(
        flops=(3 * C + 3) * B * S,                   # sub/mul/add + eps/acc
        transcendentals=B * S,                       # one sqrt per pixel
        bytes_accessed=2 * B * C * S * itemsize
        + n_split * B * acc_rows * _LANE * 4,
    )

    partials = pl.pallas_call(
        kernel,
        out_shape=jax.ShapeDtypeStruct((n_split, B, acc_rows, _LANE),
                                       jnp.float32),
        grid=(n_split, B, tiles_per_split),
        in_specs=[in_spec, in_spec],
        out_specs=out_spec,
        compiler_params=pltpu.CompilerParams(
            dimension_semantics=("parallel", "parallel", "arbitrary"),
            vmem_limit_bytes=vmem_limit),
        cost_estimate=cost,
    )(xf, yf)

    # Single cross-lane reduction + mean, done once outside the grid loop.
    return jnp.sum(partials) / float(B * S)


def loss_forward(x, y):
    """Pallas equivalent of `Loss.forward`. Returns a dict of scalars."""
    if x.ndim == 5:
        b, n, c, h, w = x.shape
        x = x.reshape(b * n, c, h, w)
        y = y.reshape(b * n, c, h, w)
    loss_sub = _charbonnier_loss_4d(x, y)
    return {"L1_Charbonnier_loss_color": loss_sub, "all": loss_sub}


def _reference_loss(x, y):
    """Pure-JAX reference for correctness checking."""
    if x.ndim == 5:
        b, n, c, h, w = x.shape
        x = x.reshape(b * n, c, h, w)
        y = y.reshape(b * n, c, h, w)
    diff = x - y
    diff_sq = diff * diff
    diff_sq_color = jnp.mean(diff_sq, axis=1, keepdims=True)
    error = jnp.sqrt(diff_sq_color + EPS * EPS)
    return jnp.mean(error)


if __name__ == "__main__":
    key = jax.random.PRNGKey(0)
    kx, ky = jax.random.split(key)

    # 1) Main NCHW case: batch=2, channels=4, spatial=16x16 (S % 128 == 0).
    B, C, H, W = 2, 4, 16, 16
    x = jax.random.normal(kx, (B, C, H, W), dtype=jnp.float32)
    y = jax.random.normal(ky, (B, C, H, W), dtype=jnp.float32)
    out = loss_forward(x, y)
    jax.block_until_ready(out)
    ref = _reference_loss(x, y)
    assert jnp.allclose(out["all"], ref, rtol=1e-5, atol=1e-6), (out["all"], ref)
    assert jnp.allclose(out["L1_Charbonnier_loss_color"], out["all"])

    # 2) 5-D path (B, N, C, H, W) flattening.
    out5 = loss_forward(x.reshape(1, B, C, H, W), y.reshape(1, B, C, H, W))
    jax.block_until_ready(out5)
    assert jnp.allclose(out5["all"], ref, rtol=1e-5, atol=1e-6)

    # 3) Flattened batch of 1: exercises the two-way row-tile split
    #    (v7x megacore path) and the masked ragged tail tile.
    k1, k2 = jax.random.split(ky)
    x1 = jax.random.normal(k1, (1, 1, 3, 48, 64), dtype=jnp.float32)
    y1 = jax.random.normal(k2, (1, 1, 3, 48, 64), dtype=jnp.float32)
    out1 = loss_forward(x1, y1)
    jax.block_until_ready(out1)
    assert jnp.allclose(out1["all"], _reference_loss(x1, y1),
                        rtol=1e-5, atol=1e-6)

    # 4) S % 128 != 0: exercises the minimal pad-to-128 + masked tail tile.
    k3, k4 = jax.random.split(k1)
    xr = jax.random.normal(k3, (2, 3, 10, 10), dtype=jnp.float32)
    yr = jax.random.normal(k4, (2, 3, 10, 10), dtype=jnp.float32)
    outr = loss_forward(xr, yr)
    jax.block_until_ready(outr)
    assert jnp.allclose(outr["all"], _reference_loss(xr, yr),
                        rtol=1e-5, atol=1e-6)

    print("KERNEL_OK")
</pallas_src>

<mosaic_0001>
module attributes {stable_mosaic.version = 11 : i64} {
  func.func @_charbonnier_kernel(%arg0: i32, %arg1: i32, %arg2: i32, %arg3: memref<1x4x2x128xf32, #tpu.memory_space<vmem>>, %arg4: memref<1x4x2x128xf32, #tpu.memory_space<vmem>>, %arg5: memref<1x1x2x128xf32, #tpu.memory_space<vmem>>) attributes {dimension_semantics = [#tpu.dimension_semantics<parallel>, #tpu.dimension_semantics<parallel>, #tpu.dimension_semantics<arbitrary>], iteration_bounds = array<i64: 1, 2, 1>, scalar_prefetch = 0 : i64, scratch_operands = 0 : i64, tpu.core_type = #tpu.core_type<tc>, window_params = [{transform_indices = @transform_0, window_bounds = array<i64: 1, 4, 2, 128>}, {transform_indices = @transform_1, window_bounds = array<i64: 1, 4, 2, 128>}, {transform_indices = @transform_2, window_bounds = array<i64: 1, 1, 2, 128>}]} {
    %c0_i32 = arith.constant 0 : i32
    %0 = arith.cmpi eq, %arg2, %c0_i32 : i32
    %1 = arith.extui %0 : i1 to i32
    %c0_i32_0 = arith.constant 0 : i32
    %2 = arith.cmpi ne, %1, %c0_i32_0 : i32
    scf.if %2 {
      %cst_38 = arith.constant 0.000000e+00 : f32
      %39 = vector.broadcast %cst_38 : f32 to vector<1x1x2x128xf32>
      %c0_39 = arith.constant 0 : index
      %c0_40 = arith.constant 0 : index
      %c0_41 = arith.constant 0 : index
      %c0_42 = arith.constant 0 : index
      %40 = vector.load %arg5[%c0_39, %c0_40, %c0_41, %c0_42] : memref<1x1x2x128xf32, #tpu.memory_space<vmem>>, vector<1x1x2x128xf32>
      tpu.vector_store %arg5[%c0_39, %c0_40, %c0_41, %c0_42], %39 {strides = array<i32>} : memref<1x1x2x128xf32, #tpu.memory_space<vmem>>, vector<1x1x2x128xf32>,
    } else {
    }
    %c0 = arith.constant 0 : index
    %c0_1 = arith.constant 0 : index
    %c0_2 = arith.constant 0 : index
    %c0_3 = arith.constant 0 : index
    %3 = vector.load %arg3[%c0, %c0_1, %c0_2, %c0_3] : memref<1x4x2x128xf32, #tpu.memory_space<vmem>>, vector<1x1x2x128xf32>
    %4 = vector.shape_cast %3 : vector<1x1x2x128xf32> to vector<2x128xf32>
    %c0_4 = arith.constant 0 : index
    %c0_5 = arith.constant 0 : index
    %c0_6 = arith.constant 0 : index
    %c0_7 = arith.constant 0 : index
    %5 = vector.load %arg4[%c0_4, %c0_5, %c0_6, %c0_7] : memref<1x4x2x128xf32, #tpu.memory_space<vmem>>, vector<1x1x2x128xf32>
    %6 = vector.shape_cast %5 : vector<1x1x2x128xf32> to vector<2x128xf32>
    %7 = arith.subf %4, %6 : vector<2x128xf32>
    %8 = arith.mulf %7, %7 : vector<2x128xf32>
    %c0_8 = arith.constant 0 : index
    %c1 = arith.constant 1 : index
    %c0_9 = arith.constant 0 : index
    %c0_10 = arith.constant 0 : index
    %9 = vector.load %arg3[%c0_8, %c1, %c0_9, %c0_10] : memref<1x4x2x128xf32, #tpu.memory_space<vmem>>, vector<1x1x2x128xf32>
    %10 = vector.shape_cast %9 : vector<1x1x2x128xf32> to vector<2x128xf32>
    %c0_11 = arith.constant 0 : index
    %c1_12 = arith.constant 1 : index
    %c0_13 = arith.constant 0 : index
    %c0_14 = arith.constant 0 : index
    %11 = vector.load %arg4[%c0_11, %c1_12, %c0_13, %c0_14] : memref<1x4x2x128xf32, #tpu.memory_space<vmem>>, vector<1x1x2x128xf32>
    %12 = vector.shape_cast %11 : vector<1x1x2x128xf32> to vector<2x128xf32>
    %13 = arith.subf %10, %12 : vector<2x128xf32>
    %14 = arith.mulf %13, %13 : vector<2x128xf32>
    %15 = arith.addf %8, %14 : vector<2x128xf32>
    %c0_15 = arith.constant 0 : index
    %c2 = arith.constant 2 : index
    %c0_16 = arith.constant 0 : index
    %c0_17 = arith.constant 0 : index
    %16 = vector.load %arg3[%c0_15, %c2, %c0_16, %c0_17] : memref<1x4x2x128xf32, #tpu.memory_space<vmem>>, vector<1x1x2x128xf32>
    %17 = vector.shape_cast %16 : vector<1x1x2x128xf32> to vector<2x128xf32>
    %c0_18 = arith.constant 0 : index
    %c2_19 = arith.constant 2 : index
    %c0_20 = arith.constant 0 : index
    %c0_21 = arith.constant 0 : index
    %18 = vector.load %arg4[%c0_18, %c2_19, %c0_20, %c0_21] : memref<1x4x2x128xf32, #tpu.memory_space<vmem>>, vector<1x1x2x128xf32>
    %19 = vector.shape_cast %18 : vector<1x1x2x128xf32> to vector<2x128xf32>
    %20 = arith.subf %17, %19 : vector<2x128xf32>
    %21 = arith.mulf %20, %20 : vector<2x128xf32>
    %22 = arith.addf %15, %21 : vector<2x128xf32>
    %c0_22 = arith.constant 0 : index
    %c3 = arith.constant 3 : index
    %c0_23 = arith.constant 0 : index
    %c0_24 = arith.constant 0 : index
    %23 = vector.load %arg3[%c0_22, %c3, %c0_23, %c0_24] : memref<1x4x2x128xf32, #tpu.memory_space<vmem>>, vector<1x1x2x128xf32>
    %24 = vector.shape_cast %23 : vector<1x1x2x128xf32> to vector<2x128xf32>
    %c0_25 = arith.constant 0 : index
    %c3_26 = arith.constant 3 : index
    %c0_27 = arith.constant 0 : index
    %c0_28 = arith.constant 0 : index
    %25 = vector.load %arg4[%c0_25, %c3_26, %c0_27, %c0_28] : memref<1x4x2x128xf32, #tpu.memory_space<vmem>>, vector<1x1x2x128xf32>
    %26 = vector.shape_cast %25 : vector<1x1x2x128xf32> to vector<2x128xf32>
    %27 = arith.subf %24, %26 : vector<2x128xf32>
    %28 = arith.mulf %27, %27 : vector<2x128xf32>
    %29 = arith.addf %22, %28 : vector<2x128xf32>
    %cst = arith.constant 2.500000e-01 : f32
    %30 = vector.broadcast %cst : f32 to vector<2x128xf32>
    %31 = arith.mulf %29, %30 : vector<2x128xf32>
    %cst_29 = arith.constant 9.99999997E-7 : f32
    %32 = vector.broadcast %cst_29 : f32 to vector<2x128xf32>
    %33 = arith.addf %31, %32 : vector<2x128xf32>
    %34 = math.sqrt %33 : vector<2x128xf32>
    %c0_30 = arith.constant 0 : index
    %c0_31 = arith.constant 0 : index
    %c0_32 = arith.constant 0 : index
    %c0_33 = arith.constant 0 : index
    %35 = vector.load %arg5[%c0_30, %c0_31, %c0_32, %c0_33] : memref<1x1x2x128xf32, #tpu.memory_space<vmem>>, vector<1x1x2x128xf32>
    %36 = vector.shape_cast %34 : vector<2x128xf32> to vector<1x1x2x128xf32>
    %37 = arith.addf %35, %36 : vector<1x1x2x128xf32>
    %c0_34 = arith.constant 0 : index
    %c0_35 = arith.constant 0 : index
    %c0_36 = arith.constant 0 : index
    %c0_37 = arith.constant 0 : index
    %38 = vector.load %arg5[%c0_34, %c0_35, %c0_36, %c0_37] : memref<1x1x2x128xf32, #tpu.memory_space<vmem>>, vector<1x1x2x128xf32>
    tpu.vector_store %arg5[%c0_34, %c0_35, %c0_36, %c0_37], %37 {strides = array<i32>} : memref<1x1x2x128xf32, #tpu.memory_space<vmem>>, vector<1x1x2x128xf32>,
    return
  }
  func.func @transform_0(%arg0: i32, %arg1: i32, %arg2: i32) -> (i32, i32, i32, i32) {
    %c1_i32 = arith.constant 1 : i32
    %0 = arith.muli %arg0, %c1_i32 : i32
    %1 = arith.addi %0, %arg2 : i32
    %c0_i32 = arith.constant 0 : i32
    %c0_i32_0 = arith.constant 0 : i32
    %c0_i32_1 = arith.constant 0 : i32
    return %arg1, %c0_i32, %1, %c0_i32_0 : i32, i32, i32, i32
  }
  func.func @transform_1(%arg0: i32, %arg1: i32, %arg2: i32) -> (i32, i32, i32, i32) {
    %c1_i32 = arith.constant 1 : i32
    %0 = arith.muli %arg0, %c1_i32 : i32
    %1 = arith.addi %0, %arg2 : i32
    %c0_i32 = arith.constant 0 : i32
    %c0_i32_0 = arith.constant 0 : i32
    %c0_i32_1 = arith.constant 0 : i32
    return %arg1, %c0_i32, %1, %c0_i32_0 : i32, i32, i32, i32
  }
  func.func @transform_2(%arg0: i32, %arg1: i32, %arg2: i32) -> (i32, i32, i32, i32) {
    %c0_i32 = arith.constant 0 : i32
    %c0_i32_0 = arith.constant 0 : i32
    %c0_i32_1 = arith.constant 0 : i32
    return %arg0, %arg1, %c0_i32, %c0_i32_0 : i32, i32, i32, i32
  }
}

</mosaic_0001>

<llo_original>
// kernel: tpu_custom_call.1
$region0: #{tpu_custom_call.1}
  #allocation0 [shape = 'u32[]', space=smem, size = 0x4, offset = 0x4, fixed_abs, tag = 'smem constant byte address 0x4 - core index']
  #allocation1 [shape = 'u32[144,128]{1,0:T(1,128)}', space=vmem, size = 0x12000, scoped, tag = 'internal scratch']
  %s0 = inlined_call_operand.hbm [shape: f32[2,4,2,128], index: 0, kind: input, shape index: {}]
  %s1 = inlined_call_operand.hbm [shape: f32[2,4,2,128], index: 1, kind: input, shape index: {}]
  %s2 = inlined_call_operand.hbm [shape: f32[1,2,2,128], index: 2, kind: output, shape index: {}]
  %s3 = sld [smem:[#allocation0]]
  $region53: #{tpu_custom_call.1} parent=0
    _
  %s5 = ssub.s32 1, %s3
  %s6 = scalar_select 0, %s5, %s3
  $region1: #{tpu_custom_call.1} parent=0
    #allocation2 [shape = 'u8[8192]{0}', space=vmem, size = 0x2000, scoped, tag = 'input window, operand 0']
    #allocation3 [shape = 's32[2]{0}', space=sflag, size = 0x8, scoped, tag = 'scoped memory for tpu_custom_call.1']
    #allocation4 [shape = 's32[2]{0}', space=sflag, size = 0x8, scoped, tag = 'scoped memory for tpu_custom_call.1']
    #allocation5 [shape = 'u8[8192]{0}', space=vmem, size = 0x2000, scoped, tag = 'input window, operand 1']
    #allocation6 [shape = 's32[2]{0}', space=sflag, size = 0x8, scoped, tag = 'scoped memory for tpu_custom_call.1']
    #allocation7 [shape = 'u8[2048]{0}', space=vmem, size = 0x800, scoped, tag = 'output window, operand 0']
    %7 = vsyncpa [#allocation3], 0
    %s8 = scalar_lea.sflag [#allocation3], 1
    %9 = vsyncpa %s8, 0
    %10 = vsyncpa [#allocation6], 0
    %s11 = scalar_lea.sflag [#allocation6], 1
    %12 = vsyncpa %s11, 0
    %13 = vsyncpa [#allocation4], 0
    %s14 = scalar_lea.sflag [#allocation4], 1
    %15 = vsyncpa %s14, 0
    loop: start=0, step=1, limit=4
    $region2: #{tpu_custom_call.1} parent=1 // loop_pre_header
      _
    $region3: #{tpu_custom_call.1} parent=1 // loop_header
      %s17 = sphi 0, %s21
      %p18 = scmp.ge.s32.totalorder %s17, 4
      %s24 = sphi 0, %s43
      %s25 = sphi 0, %s39
      %s26 = sphi 0, %s35
      %s27 = sphi 0, %s24
      %s28 = sphi 0, %s25
      %s29 = sphi 0, %s26
      %s30 = sphi 0, %s27
      %s31 = sphi 0, %s28
      %s32 = sphi 0, %s29
      %s50 = sphi 0, %s52
      %s53 = sphi 0, %s50
      %s54 = sphi 0, %s53
      %s70 = sphi 0, %s54
      %s80 = sphi 0, %s82
      %s83 = sphi 0, %s80
      %s84 = sphi 0, %s83
      %s100 = sphi 0, %s84
      %s108 = sphi 0, %s110
      %s111 = sphi 0, %s108
      %s112 = sphi 0, %s111
      %s128 = sphi 0, %s112
    $region4: #{tpu_custom_call.1} parent=1 // loop_header_branch
      %20 = sbr.rel (%p18) target = $region8
    $region5: #{tpu_custom_call.1} parent=1 // loop_body
      %s22 = ssub.s32 %s17, 1
      %s23 = ssub.s32 %s17, 2
      %s33 = sadd.s32 1, %s26
      %p34 = scmp.ge.s32.totalorder %s33, 1
      %s35 = scalar_select %p34, 0, %s33
      %s36 = sadd.s32 1, %s25
      %s37 = scalar_select %p34, %s36, %s25
      %p38 = scmp.ge.s32.totalorder %s37, 2
      %s39 = scalar_select %p38, 0, %s37
      %s40 = sadd.s32 1, %s24
      %s41 = scalar_select %p38, %s40, %s24
      %p42 = scmp.ge.s32.totalorder %s41, 1
      %s43 = scalar_select %p42, 0, %s41
      %s44 = sadd.s32 %s24, %s26
      %s45 = sadd.s32 %s43, %s35
      %s46 = ssub.s32 %s25, %s39
      %s47 = ssub.s32 %s44, %s45
      %s48 = sor.u32 %s46, %s47
      %p49 = scmp.eq.s32.totalorder %s48, 0
      %s51 = sadd.s32 %s50, 1
      %s52 = scalar_select %p49, %s50, %s51
      %p55 = pneg %p49
      %p56 = scmp.eq.s32.totalorder %s17, 1
      %p57 = por %p55, %p56
      %p58 = scmp.ne.s32.totalorder %s50, %s53
      %p59 = scmp.eq.s32.totalorder %s17, 0
      %p60 = por %p58, %p59
      %p61 = scmp.ne.s32.totalorder %s50, %s53
      %p62 = scmp.eq.s32.totalorder %s22, 1
      %p63 = por %p61, %p62
      %p64 = scmp.ne.s32.totalorder %s53, %s54
      %p65 = scmp.eq.s32.totalorder %s22, 0
      %p66 = por %p64, %p65
      %p67 = scmp.ne.s32.totalorder %s53, %s54
      %p68 = scmp.eq.s32.totalorder %s23, 1
      %p69 = por %p67, %p68
      %p71 = scmp.ne.s32.totalorder %s54, %s70
      %p72 = scmp.eq.s32.totalorder %s23, 0
      %p73 = por %p71, %p72
      %s74 = sadd.s32 %s24, %s26
      %s75 = sadd.s32 %s43, %s35
      %s76 = ssub.s32 %s25, %s39
      %s77 = ssub.s32 %s74, %s75
      %s78 = sor.u32 %s76, %s77
      %p79 = scmp.eq.s32.totalorder %s78, 0
      %s81 = sadd.s32 %s80, 1
      %s82 = scalar_select %p79, %s80, %s81
      %p85 = pneg %p79
      %p86 = scmp.eq.s32.totalorder %s17, 1
      %p87 = por %p85, %p86
      %p88 = scmp.ne.s32.totalorder %s80, %s83
      %p89 = scmp.eq.s32.totalorder %s17, 0
      %p90 = por %p88, %p89
      %p91 = scmp.ne.s32.totalorder %s80, %s83
      %p92 = scmp.eq.s32.totalorder %s22, 1
      %p93 = por %p91, %p92
      %p94 = scmp.ne.s32.totalorder %s83, %s84
      %p95 = scmp.eq.s32.totalorder %s22, 0
      %p96 = por %p94, %p95
      %p97 = scmp.ne.s32.totalorder %s83, %s84
      %p98 = scmp.eq.s32.totalorder %s23, 1
      %p99 = por %p97, %p98
      %p101 = scmp.ne.s32.totalorder %s84, %s100
      %p102 = scmp.eq.s32.totalorder %s23, 0
      %p103 = por %p101, %p102
      %s104 = ssub.s32 %s24, %s43
      %s105 = ssub.s32 %s25, %s39
      %s106 = sor.u32 %s104, %s105
      %p107 = scmp.eq.s32.totalorder %s106, 0
      %s109 = sadd.s32 %s108, 1
      %s110 = scalar_select %p107, %s108, %s109
      %p113 = pneg %p107
      %p114 = scmp.eq.s32.totalorder %s17, 1
      %p115 = por %p113, %p114
      %p116 = scmp.ne.s32.totalorder %s108, %s111
      %p117 = scmp.eq.s32.totalorder %s17, 0
      %p118 = por %p116, %p117
      %p119 = scmp.ne.s32.totalorder %s108, %s111
      %p120 = scmp.eq.s32.totalorder %s22, 1
      %p121 = por %p119, %p120
      %p122 = scmp.ne.s32.totalorder %s111, %s112
      %p123 = scmp.eq.s32.totalorder %s22, 0
      %p124 = por %p122, %p123
      %p125 = scmp.ne.s32.totalorder %s111, %s112
      %p126 = scmp.eq.s32.totalorder %s23, 1
      %p127 = por %p125, %p126
      %p129 = scmp.ne.s32.totalorder %s112, %s128
      %p130 = scmp.eq.s32.totalorder %s23, 0
      %p131 = por %p129, %p130
      %p132 = scmp.le.s32.totalorder 1, %s17
      %p133 = scmp.lt.s32.totalorder %s17, 3
      %p134 = pnand %p132, %p133
      %p135 = pneg %p134
      // Predicated region
      $region9: #{tpu_custom_call.1} parent=5 // pred_check
        _
      $region10: #{tpu_custom_call.1} parent=5 // pred_check_branch
        %137 = sbr.rel (%p134) target = $region12
      $region11: #{tpu_custom_call.1} parent=5 // pred_region
        %s138 = ssub.s32 %s17, 1
      $region12: #{tpu_custom_call.1} parent=5 // pred_fallthru
        _
      %p139 = scmp.lt.s32.totalorder %s17, 2
      // Predicated region
      $region13: #{tpu_custom_call.1} parent=5 // pred_check
        %p140 = pneg %p139
      $region14: #{tpu_custom_call.1} parent=5 // pred_check_branch
        %142 = sbr.rel (%p140) target = $region16
      $region15: #{tpu_custom_call.1} parent=5 // pred_region
        // Predicated region
        $region17: #{tpu_custom_call.1} parent=15 // pred_check
          %p143 = pneg %p60
        $region18: #{tpu_custom_call.1} parent=15 // pred_check_branch
          %145 = sbr.rel (%p143) target = $region20
        $region19: #{tpu_custom_call.1} parent=15 // pred_region
          %s146 = sand.u32 %s50, 1
          %s147 = scalar_lea.sflag [#allocation3], %s146
          %s148 = sand.u32 %s50, 1
          %s149 = smul.addr %s148, 8
          %s150 = scalar_lea.vmem [#allocation2], %s149
          %s151 = sadd.s32 %s24, %s26
          %s153 = ssub.s32 128, 128
          %154 = vsyncadd %s147, %s153
          %s155 = smul.addr %s25, 4
          %s156 = sadd.s32 %s151, %s155
          %s157 = smul.addr %s156, 32
          %s158 = scalar_lea.hbm %s0, %s157
          %s159 = sshll.u32 %s150, 4
          %s160 = int_to_ptr.vmem [resolvable:$true] %s159
          %165 = dma.hbm_to_vmem [thread:$0]  %s158, 128, %s160, %s147, 32, 32, 2
        $region20: #{tpu_custom_call.1} parent=15 // pred_fallthru
          _
        // Predicated region
        $region21: #{tpu_custom_call.1} parent=15 // pred_check
          %p166 = pneg %p90
        $region22: #{tpu_custom_call.1} parent=15 // pred_check_branch
          %168 = sbr.rel (%p166) target = $region24
        $region23: #{tpu_custom_call.1} parent=15 // pred_region
          %s169 = sand.u32 %s80, 1
          %s170 = scalar_lea.sflag [#allocation6], %s169
          %s171 = sand.u32 %s80, 1
          %s172 = smul.addr %s171, 8
          %s173 = scalar_lea.vmem [#allocation5], %s172
          %s174 = sadd.s32 %s24, %s26
          %s176 = ssub.s32 128, 128
          %177 = vsyncadd %s170, %s176
          %s178 = smul.addr %s25, 4
          %s179 = sadd.s32 %s174, %s178
          %s180 = smul.addr %s179, 32
          %s181 = scalar_lea.hbm %s1, %s180
          %s182 = sshll.u32 %s173, 4
          %s183 = int_to_ptr.vmem [resolvable:$true] %s182
          %188 = dma.hbm_to_vmem [thread:$0]  %s181, 128, %s183, %s170, 32, 32, 2
        $region24: #{tpu_custom_call.1} parent=15 // pred_fallthru
          _
      $region16: #{tpu_custom_call.1} parent=5 // pred_fallthru
        _
      %p189 = scmp.le.s32.totalorder 1, %s17
      %p190 = scmp.lt.s32.totalorder %s17, 3
      %p191 = pnand %p189, %p190
      %p192 = pneg %p191
      // Predicated region
      $region25: #{tpu_custom_call.1} parent=5 // pred_check
        _
      $region26: #{tpu_custom_call.1} parent=5 // pred_check_branch
        %194 = sbr.rel (%p191) target = $region28
      $region27: #{tpu_custom_call.1} parent=5 // pred_region
        %s195 = ssub.s32 %s17, 1
        %s196 = sand.u32 %s53, 1
        %s197 = scalar_lea.sflag [#allocation3], %s196
        %s198 = sand.u32 %s53, 1
        %s199 = smul.addr %s198, 8
        %s200 = scalar_lea.vmem [#allocation2], %s199
        // Predicated region
        $region29: #{tpu_custom_call.1} parent=27 // pred_check
          %p201 = pneg %p66
        $region30: #{tpu_custom_call.1} parent=27 // pred_check_branch
          %203 = sbr.rel (%p201) target = $region32
        $region31: #{tpu_custom_call.1} parent=27 // pred_region
          %204 = dma.done %s197, 128
        $region32: #{tpu_custom_call.1} parent=27 // pred_fallthru
          _
        %s205 = sand.u32 %s83, 1
        %s206 = scalar_lea.sflag [#allocation6], %s205
        %s207 = sand.u32 %s83, 1
        %s208 = smul.addr %s207, 8
        %s209 = scalar_lea.vmem [#allocation5], %s208
        // Predicated region
        $region33: #{tpu_custom_call.1} parent=27 // pred_check
          %p210 = pneg %p96
        $region34: #{tpu_custom_call.1} parent=27 // pred_check_branch
          %212 = sbr.rel (%p210) target = $region36
        $region35: #{tpu_custom_call.1} parent=27 // pred_region
          %213 = dma.done %s206, 128
        $region36: #{tpu_custom_call.1} parent=27 // pred_fallthru
          _
        %s214 = sand.u32 %s53, 1
        %s215 = scalar_lea.sflag [#allocation3], %s214
        %s216 = sand.u32 %s53, 1
        %s217 = smul.addr %s216, 8
        %s218 = scalar_lea.vmem [#allocation2], %s217
        %p219 = pneg %p66
        %p220 = pneg %p63
        %s221 = sand.u32 %s83, 1
        %s222 = scalar_lea.sflag [#allocation6], %s221
        %s223 = sand.u32 %s83, 1
        %s224 = smul.addr %s223, 8
        %s225 = scalar_lea.vmem [#allocation5], %s224
        %p226 = pneg %p96
        %p227 = pneg %p93
        %p228 = pneg %p124
        %p229 = pneg %p121
        %s230 = sand.u32 %s111, 1
        %s231 = scalar_lea.sflag [#allocation4], %s230
        %s232 = sand.u32 %s111, 1
        %s233 = smul.addr %s232, 2
        %s234 = scalar_lea.vmem [#allocation7], %s233
        %s235 = sadd.s32 %s27, %s29
        %s236 = sadd.s32 %s27, %s29
        %p237 = scmp.eq.s32.totalorder %s29, 0
        // Predicated region
        $region37: #{tpu_custom_call.1} parent=27 // pred_check
          %p238 = pneg %p237
        $region38: #{tpu_custom_call.1} parent=27 // pred_check_branch
          %240 = sbr.rel (%p238) target = $region40
        $region39: #{tpu_custom_call.1} parent=27 // pred_region
          %241 = vst [vmem:[%s234] sm:$0x3] 0.0
        $region40: #{tpu_custom_call.1} parent=27 // pred_fallthru
          _
        %v242 = vld [vmem:[%s200] sm:$0x3]
        %v243 = vld [vmem:[%s209] sm:$0x3]
        %v244 = vsub.f32 %v242, %v243
        %v245 = vmul.f32 %v244, %v244
        %s246 = scalar_lea.vmem %s200, 2 [#allocation2]
        %v247 = vld [vmem:[%s246] sm:$0x3]
        %s248 = scalar_lea.vmem %s209, 2 [#allocation5]
        %v249 = vld [vmem:[%s248] sm:$0x3]
        %v250 = vsub.f32 %v247, %v249
        %v251 = vmul.f32 %v250, %v250
        %v252 = vadd.f32 %v245, %v251
        %s253 = scalar_lea.vmem %s200, 4 [#allocation2]
        %v254 = vld [vmem:[%s253] sm:$0x3]
        %s255 = scalar_lea.vmem %s209, 4 [#allocation5]
        %v256 = vld [vmem:[%s255] sm:$0x3]
        %v257 = vsub.f32 %v254, %v256
        %v258 = vmul.f32 %v257, %v257
        %v259 = vadd.f32 %v252, %v258
        %s260 = scalar_lea.vmem %s200, 6 [#allocation2]
        %v261 = vld [vmem:[%s260] sm:$0x3]
        %s262 = scalar_lea.vmem %s209, 6 [#allocation5]
        %v263 = vld [vmem:[%s262] sm:$0x3]
        %v264 = vsub.f32 %v261, %v263
        %v265 = vmul.f32 %v264, %v264
        %v266 = vadd.f32 %v259, %v265
        %v267 = vmul.f32 %v266, 0.25
        %v268 = vadd.f32 %v267, 1e-06
        %v269 = vrsqrt.pop %v268
        %v270 = vmul.f32 %v268, %v269
        %vm271 = vcmp.eq.f32.partialorder %v268, inf
        %v272 = vsel %vm271, %v268, %v270
        %vm273 = vcmp.eq.f32.partialorder %v268, 0.0
        %v274 = vand.u32 %v268, 2147483648
        %v275 = vsel %vm273, %v274, %v272
        %v276 = vld [vmem:[%s234] sm:$0x3]
        %v277 = vadd.f32 %v276, %v275
        %278 = vst [vmem:[%s234] sm:$0x3] %v277
        %s279 = sand.u32 %s111, 1
        %s280 = scalar_lea.sflag [#allocation4], %s279
        %s281 = sand.u32 %s111, 1
        %s282 = smul.addr %s281, 2
        %s283 = scalar_lea.vmem [#allocation7], %s282
        // Predicated region
        $region41: #{tpu_custom_call.1} parent=27 // pred_check
          %p284 = pneg %p121
        $region42: #{tpu_custom_call.1} parent=27 // pred_check_branch
          %286 = sbr.rel (%p284) target = $region44
        $region43: #{tpu_custom_call.1} parent=27 // pred_region
          %s288 = ssub.s32 32, 32
          %289 = vsyncadd %s280, %s288
          %s290 = smul.addr %s27, 2
          %s291 = sadd.s32 %s28, %s290
          %s292 = smul.addr %s291, 32
          %s293 = scalar_lea.hbm %s2, %s292
          %s295 = sshll.u32 %s283, 4
          %s296 = int_to_ptr.vmem [resolvable:$true] %s295
          %298 = dma.vmem_to_hbm [thread:$0]  %s296, 32, %s293, %s280
        $region44: #{tpu_custom_call.1} parent=27 // pred_fallthru
          _
      $region28: #{tpu_custom_call.1} parent=5 // pred_fallthru
        _
      %p299 = scmp.le.s32.totalorder 2, %s17
      // Predicated region
      $region45: #{tpu_custom_call.1} parent=5 // pred_check
        %p300 = pneg %p299
      $region46: #{tpu_custom_call.1} parent=5 // pred_check_branch
        %302 = sbr.rel (%p300) target = $region48
      $region47: #{tpu_custom_call.1} parent=5 // pred_region
        %s303 = ssub.s32 %s17, 2
        // Predicated region
        $region49: #{tpu_custom_call.1} parent=47 // pred_check
          %p304 = pneg %p127
        $region50: #{tpu_custom_call.1} parent=47 // pred_check_branch
          %306 = sbr.rel (%p304) target = $region52
        $region51: #{tpu_custom_call.1} parent=47 // pred_region
          %s307 = sand.u32 %s112, 1
          %s308 = scalar_lea.sflag [#allocation4], %s307
          %s309 = sand.u32 %s112, 1
          %s310 = smul.addr %s309, 2
          %s311 = scalar_lea.vmem [#allocation7], %s310
          %312 = dma.done %s308, 32
        $region52: #{tpu_custom_call.1} parent=47 // pred_fallthru
          _
      $region48: #{tpu_custom_call.1} parent=5 // pred_fallthru
        _
    $region6: #{tpu_custom_call.1} parent=1 // loop_footer
      %s21 = sadd.s32 1, %s17
    $region7: #{tpu_custom_call.1} parent=1 // loop_footer_branch
      %16 = sbr.rel target = $region3
    $region8: #{tpu_custom_call.1} parent=1 // loop_exit
      _
    %313 = vsyncpa [#allocation3], 1
    %s314 = scalar_lea.sflag [#allocation3], 1
    %315 = vsyncpa %s314, 1
    %316 = vsyncpa [#allocation6], 1
    %s317 = scalar_lea.sflag [#allocation6], 1
    %318 = vsyncpa %s317, 1
    %319 = vsyncpa [#allocation4], 1
    %s320 = scalar_lea.sflag [#allocation4], 1
    %321 = vsyncpa %s320, 1

</llo_original>
